<compile_context>
chip_gen: v5e
topology: v5e:2x2
jax: 0.10.0
libtpu: 0.0.40
codegen_flags: <defaults>
</compile_context>

<pallas_src>
import functools
import math

import jax
import jax.numpy as jnp
import numpy as np
from jax.experimental import pallas as pl
from jax.experimental.pallas import tpu as pltpu

_MiB = 1024 * 1024

# Row layout of the packed per-channel parameter array (16, C):
#   rows 0..6 : depthwise conv taps   w_dw[k, c] == torch dwconv.weight[c, 0, k]
#   row  7    : depthwise conv bias
#   row  8    : LayerNorm weight
#   row  9    : LayerNorm bias
#   row 10    : pwconv2 bias
#   row 11    : gamma (layer scale)
#   rows 12..15: zero padding (keeps the block 8-row aligned)
_DW_TAPS = slice(0, 7)
_ROW_DW_B, _ROW_LN_W, _ROW_LN_B, _ROW_B2, _ROW_GAMMA = 7, 8, 9, 10, 11


@functools.lru_cache(maxsize=1)
def _physical_vmem_bytes():
    """Physical per-core VMEM; falls back to 128 MiB (v5e/v6e) if unknown."""
    try:
        return int(pltpu.get_tpu_info().vmem_capacity_bytes)
    except Exception:  # query unavailable (e.g. older API) -> conservative path
        return 128 * _MiB


def _const_block_spec(block_shape, index_map):
    """BlockSpec for grid-invariant parameter blocks, single-buffered.

    Double-buffering a block whose index_map is constant is pure VMEM waste;
    pl.Buffered(1) frees that copy (review item, v7x).  Falls back cleanly on
    JAX versions without pipeline_mode / Buffered.
    """
    try:
        return pl.BlockSpec(block_shape, index_map,
                            pipeline_mode=pl.Buffered(1))
    except (AttributeError, TypeError, ValueError):
        return pl.BlockSpec(block_shape, index_map)


def _convnext_block_kernel(xl_ref, x_ref, xr_ref, vec_ref, w1_ref, b1_ref,
                           w2_ref, o_ref, *, tile_i, gelu_approx):
    f32 = jnp.float32
    x = x_ref[0].astype(f32)                      # (tile_t, C) current tile
    tile_t, C = x.shape
    t = pl.program_id(0)
    nt = pl.num_programs(0)

    # ---- conv halos: the 8 rows immediately left/right of this tile.  At the
    # sequence ends the index_map clamps to a valid block; mask it to zero so
    # the conv sees the same zero padding as torch Conv1d(padding=3).
    xl = jnp.where(t == 0, 0.0, xl_ref[0].astype(f32))        # (8, C)
    xr = jnp.where(t == nt - 1, 0.0, xr_ref[0].astype(f32))   # (8, C)

    # ---- depthwise conv1d, kernel_size=7, padding=3, groups=C ---------------
    # [left 8 | tile | right 8]: every piece is a multiple of 8 rows, so the
    # concat is a plain sublane-block copy.
    xh = jnp.concatenate([xl, x, xr], axis=0)     # (tile_t + 16, C)
    # Output row i (global tile_start + i) needs global rows ..i-3 .. i+3,
    # which are xh rows i+5 .. i+11  ->  tap k reads xh[i + 5 + k].
    dw = jnp.zeros((tile_t, C), f32)
    for k in range(7):                            # static unroll, 7 taps
        dw = dw + xh[5 + k:5 + k + tile_t, :] * vec_ref[k:k + 1, :]
    dw = dw + vec_ref[_ROW_DW_B:_ROW_DW_B + 1, :]

    # ---- LayerNorm over channels (lane axis), eps = 1e-6 --------------------
    mean = jnp.mean(dw, axis=-1, keepdims=True)
    xc = dw - mean
    var = jnp.mean(xc * xc, axis=-1, keepdims=True)
    xn = xc * jax.lax.rsqrt(var + 1e-6)
    xn = (xn * vec_ref[_ROW_LN_W:_ROW_LN_W + 1, :]
          + vec_ref[_ROW_LN_B:_ROW_LN_B + 1, :])

    # ---- pwconv1 -> GELU -> pwconv2 -----------------------------------------
    def act(h):
        if gelu_approx:
            # tanh-approx GELU: the transcendental lands on the EUP slot (a
            # free VLIW slot) instead of a ~20-op VPU erf polynomial that was
            # the binding unit on v6e/v7x.
            c0 = jnp.float32(math.sqrt(2.0 / math.pi))
            c1 = jnp.float32(0.044715)
            return 0.5 * h * (1.0 + jnp.tanh(c0 * (h + c1 * h * h * h)))
        # Exact (erf) GELU -- matches torch nn.GELU() semantics; keep on v5e
        # where the VALU polynomial hides under the slow MXU.
        return 0.5 * h * (1.0 + jax.lax.erf(h * jnp.float32(1.0 / math.sqrt(2.0))))

    # bf16 operands feed the MXU at full rate; accumulation stays in f32.
    xn_mm = xn.astype(w1_ref.dtype)
    inter = w1_ref.shape[1]
    n_chunks = pl.cdiv(inter, tile_i)
    if n_chunks == 1:
        # Un-chunked intermediate (v5e/v6e default): no y partial-sum passes,
        # full-K contraction for the second matmul.
        h = jnp.dot(xn_mm, w1_ref[...], preferred_element_type=f32) + b1_ref[0:1, :]
        h = act(h)
        y = jnp.dot(h.astype(w2_ref.dtype), w2_ref[...], preferred_element_type=f32)
    else:
        # Chunk over the intermediate dim so the (tile_t, I) GELU intermediate
        # never dominates live VMEM (v7x).
        y = jnp.zeros((tile_t, C), f32)
        for start in range(0, inter, tile_i):     # static unroll over I chunks
            end = min(start + tile_i, inter)
            h = jnp.dot(xn_mm, w1_ref[:, start:end],
                        preferred_element_type=f32) + b1_ref[0:1, start:end]
            h = act(h)
            y = y + jnp.dot(h.astype(w2_ref.dtype), w2_ref[start:end, :],
                            preferred_element_type=f32)

    # ---- pwconv2 bias, layer scale, residual --------------------------------
    y = (y + vec_ref[_ROW_B2:_ROW_B2 + 1, :]) * vec_ref[_ROW_GAMMA:_ROW_GAMMA + 1, :]
    o_ref[0] = (x + y).astype(o_ref.dtype)


def convnext_block_btc(x_btc, params, *, tile_t=None, tile_i=None,
                       gelu="tanh", vmem_limit_bytes=None):
    """ConvNeXtBlock forward on channels-last input: (B, T, C) -> (B, T, C).

    Production entry point: keep the whole backbone channels-last (no per-block
    HBM transpose) and, on v6e/v7x, feed bf16 activations (halves HBM traffic
    and the x/out tile VMEM; internal conv/LN/residual math stays f32).
    gelu: "tanh" (approx, EUP; default) or "exact" (erf, matches torch nn.GELU).
    """
    vecs, w1, b1, w2 = params
    B, T, C = x_btc.shape
    inter = w1.shape[1]

    # Per-generation defaults (review items: tile sizing + VMEM budget).
    phys_vmem = _physical_vmem_bytes()
    if vmem_limit_bytes is None:
        # 3/4 of physical: ~48 MiB on v7x (64 MiB), ~96 MiB on v5e/v6e
        # (128 MiB).  Never the full physical size -- leave headroom for
        # compiler scratch / semaphores / DMA descriptors.
        vmem_limit_bytes = (phys_vmem * 3) // 4
    if tile_t is None:
        tile_t = 512 if phys_vmem >= 128 * _MiB else 256
    if tile_i is None:
        tile_i = inter if phys_vmem >= 128 * _MiB else min(512, inter)

    # Time tile: multiple of 8, >= 8, never larger than the (rounded) sequence.
    tile_t = max(8, min(int(tile_t), pl.cdiv(T, 8) * 8))
    tile_t -= tile_t % 8
    T_pad = pl.cdiv(T, tile_t) * tile_t
    if T_pad != T:
        # Zero rows behave exactly like the conv's zero padding; the padded
        # tail of the output is sliced off below.
        x_btc = jnp.pad(x_btc, ((0, 0), (0, T_pad - T), (0, 0)))
    n_t = T_pad // tile_t
    tb = tile_t // 8                  # tile size in units of 8-row blocks
    n_row_blocks = T_pad // 8
    tile_i = max(1, min(int(tile_i), inter))

    kernel = functools.partial(_convnext_block_kernel, tile_i=tile_i,
                               gelu_approx=(gelu != "exact"))
    out = pl.pallas_call(
        kernel,
        out_shape=jax.ShapeDtypeStruct((B, T_pad, C), x_btc.dtype),
        # Time axis first so the megacore / 2-TC core split lands on the large,
        # even time-tile count even for B = 1-2 (v7x single-batch inference).
        grid=(n_t, B),
        in_specs=[
            # 8-row block just left of the tile (left halo); clamped at t == 0.
            pl.BlockSpec((1, 8, C),
                         lambda t, b: (b, jnp.maximum(t * tb - 1, 0), 0)),
            # the tile itself
            pl.BlockSpec((1, tile_t, C), lambda t, b: (b, t, 0)),
            # 8-row block just right of the tile (right halo); clamped at end.
            pl.BlockSpec((1, 8, C),
                         lambda t, b: (b, jnp.minimum((t + 1) * tb,
                                                      n_row_blocks - 1), 0)),
            # Grid-invariant parameter blocks: single-buffered (Buffered(1)).
            _const_block_spec((16, C), lambda t, b: (0, 0)),      # packed vecs
            _const_block_spec((C, inter), lambda t, b: (0, 0)),   # w1 (bf16)
            _const_block_spec((1, inter), lambda t, b: (0, 0)),   # b1 (f32)
            _const_block_spec((inter, C), lambda t, b: (0, 0)),   # w2 (bf16)
        ],
        out_specs=pl.BlockSpec((1, tile_t, C), lambda t, b: (b, t, 0)),
        compiler_params=pltpu.CompilerParams(
            dimension_semantics=("parallel", "parallel"),
            vmem_limit_bytes=int(vmem_limit_bytes),
        ),
    )(x_btc, x_btc, x_btc, vecs, w1, b1, w2)

    if T_pad != T:
        out = out[:, :T, :]
    return out


def convnext_block(x_bct, params, **kwargs):
    """Drop-in NCL wrapper matching the PyTorch module: (B, C, T) -> (B, C, T).

    The two transposes are layout plumbing for API parity only; in a full vocos
    model call `convnext_block_btc` on channels-last activations.
    """
    x_btc = jnp.transpose(x_bct, (0, 2, 1))
    y = convnext_block_btc(x_btc, params, **kwargs)
    return jnp.transpose(y, (0, 2, 1))


def init_params(key, dim, intermediate_dim, layer_scale_init_value):
    """Synthetic parameters in PyTorch-equivalent layout (all f32)."""
    ks = jax.random.split(key, 6)
    f32 = jnp.float32
    w_dw = 0.1 * jax.random.normal(ks[0], (7, dim), f32)
    b_dw = 0.1 * jax.random.normal(ks[1], (dim,), f32)
    ln_w = jnp.ones((dim,), f32)
    ln_b = jnp.zeros((dim,), f32)
    w1 = (1.0 / math.sqrt(dim)) * jax.random.normal(
        ks[2], (dim, intermediate_dim), f32)
    b1 = 0.1 * jax.random.normal(ks[3], (intermediate_dim,), f32)
    w2 = (1.0 / math.sqrt(intermediate_dim)) * jax.random.normal(
        ks[4], (intermediate_dim, dim), f32)
    b2 = 0.1 * jax.random.normal(ks[5], (dim,), f32)
    gamma = jnp.full((dim,), layer_scale_init_value, f32)
    return (w_dw, b_dw, ln_w, ln_b, w1, b1, w2, b2, gamma)


def pack_params(raw_params, matmul_dtype=jnp.bfloat16):
    """Pack raw parameters into the kernel layout.

    * 7 conv taps + 5 per-channel vectors -> one (16, C) f32 array (one DMA).
    * w1 / w2 stored in bf16 (full-rate MXU, half the weight VMEM/HBM traffic);
      accumulation stays f32 in-kernel.
    Perf note: for production, C and I should be multiples of 128 (lane-dense
    stores, non-ragged matmul N/K).  C is NOT auto-padded here because the
    LayerNorm statistics must be over the true channel count.
    """
    w_dw, b_dw, ln_w, ln_b, w1, b1, w2, b2, gamma = raw_params
    C = w_dw.shape[1]
    vecs = jnp.zeros((16, C), jnp.float32)
    vecs = vecs.at[_DW_TAPS].set(w_dw.astype(jnp.float32))
    vecs = vecs.at[_ROW_DW_B].set(b_dw)
    vecs = vecs.at[_ROW_LN_W].set(ln_w)
    vecs = vecs.at[_ROW_LN_B].set(ln_b)
    vecs = vecs.at[_ROW_B2].set(b2)
    vecs = vecs.at[_ROW_GAMMA].set(gamma)
    return (vecs,
            w1.astype(matmul_dtype),
            b1.reshape(1, -1).astype(jnp.float32),
            w2.astype(matmul_dtype))


def convnext_block_ref(x_bct, packed_params):
    """Pure-JAX f32 reference mirroring the PyTorch forward (exact-erf GELU)."""
    vecs, w1, b1, w2 = packed_params
    f32 = jnp.float32
    x = x_bct.astype(f32)
    _, _, T = x.shape
    w_dw = vecs[_DW_TAPS]
    xp = jnp.pad(x, ((0, 0), (0, 0), (3, 3)))
    dw = vecs[_ROW_DW_B][None, :, None]
    for k in range(7):
        dw = dw + xp[:, :, k:k + T] * w_dw[k][None, :, None]
    h = jnp.transpose(dw, (0, 2, 1))                          # (B, T, C)
    mean = jnp.mean(h, axis=-1, keepdims=True)
    var = jnp.mean((h - mean) ** 2, axis=-1, keepdims=True)
    h = (h - mean) * jax.lax.rsqrt(var + 1e-6) * vecs[_ROW_LN_W] + vecs[_ROW_LN_B]
    h = h @ w1.astype(f32) + b1[0].astype(f32)
    h = 0.5 * h * (1.0 + jax.lax.erf(h * jnp.float32(1.0 / math.sqrt(2.0))))
    y = h @ w2.astype(f32) + vecs[_ROW_B2]
    y = y * vecs[_ROW_GAMMA]
    return (x + jnp.transpose(y, (0, 2, 1))).astype(x_bct.dtype)


if __name__ == "__main__":
    key = jax.random.PRNGKey(0)
    k_x, k_p = jax.random.split(key)

    # Small demo shapes (NCL like the PyTorch module).  tile_t / tile_i are
    # deliberately small so the demo exercises multiple time tiles (conv halo
    # path, both boundaries) and multiple intermediate-dim chunks.
    # Production: C, I multiples of 128, defaults for tile_t / tile_i / vmem.
    B, C, T = 2, 8, 64
    intermediate_dim = 32
    layer_scale_init_value = 0.1

    x = jax.random.normal(k_x, (B, C, T), jnp.float32)
    raw = init_params(k_p, C, intermediate_dim, layer_scale_init_value)
    params = pack_params(raw)
    ref = convnext_block_ref(x, params)

    # 1) Default path: tanh-approx GELU, f32 I/O, 4 time tiles x 2 I chunks.
    fwd = jax.jit(functools.partial(convnext_block, tile_t=16, tile_i=16))
    out = fwd(x, params)
    jax.block_until_ready(out)
    assert out.shape == (B, C, T) and out.dtype == jnp.float32
    np.testing.assert_allclose(np.asarray(out), np.asarray(ref),
                               rtol=2e-2, atol=2e-2)

    # 2) Exact-erf GELU path (torch-faithful; recommended on v5e), single time
    #    tile / un-chunked intermediate branch.
    fwd_exact = jax.jit(functools.partial(convnext_block, tile_t=64, tile_i=32,
                                          gelu="exact"))
    out2 = fwd_exact(x, params)
    jax.block_until_ready(out2)
    np.testing.assert_allclose(np.asarray(out2), np.asarray(ref),
                               rtol=2e-2, atol=2e-2)

    # 3) bf16 activation I/O on the channels-last entry point (production
    #    recommendation on v6e/v7x).
    x_btc_bf16 = jnp.transpose(x, (0, 2, 1)).astype(jnp.bfloat16)
    fwd_bf16 = jax.jit(functools.partial(convnext_block_btc, tile_t=16, tile_i=16))
    out3 = fwd_bf16(x_btc_bf16, params)
    jax.block_until_ready(out3)
    assert out3.dtype == jnp.bfloat16
    ref_btc = jnp.transpose(ref, (0, 2, 1))
    np.testing.assert_allclose(np.asarray(out3.astype(jnp.float32)),
                               np.asarray(ref_btc), rtol=5e-2, atol=5e-2)

    print("KERNEL_OK")
</pallas_src>

<mosaic_0001>
module attributes {stable_mosaic.version = 11 : i64} {
  func.func @_convnext_block_kernel(%arg0: i32, %arg1: i32, %arg2: memref<1x8x8xf32, #tpu.memory_space<vmem>>, %arg3: memref<1x16x8xf32, #tpu.memory_space<vmem>>, %arg4: memref<1x8x8xf32, #tpu.memory_space<vmem>>, %arg5: memref<16x8xf32, #tpu.memory_space<vmem>>, %arg6: memref<8x32xbf16, #tpu.memory_space<vmem>>, %arg7: memref<1x32xf32, #tpu.memory_space<vmem>>, %arg8: memref<32x8xbf16, #tpu.memory_space<vmem>>, %arg9: memref<1x16x8xf32, #tpu.memory_space<vmem>>) attributes {dimension_semantics = [#tpu.dimension_semantics<parallel>, #tpu.dimension_semantics<parallel>], iteration_bounds = array<i64: 4, 2>, scalar_prefetch = 0 : i64, scratch_operands = 0 : i64, tpu.core_type = #tpu.core_type<tc>, window_params = [{transform_indices = @transform_0, window_bounds = array<i64: 1, 8, 8>}, {transform_indices = @transform_1, window_bounds = array<i64: 1, 16, 8>}, {transform_indices = @transform_2, window_bounds = array<i64: 1, 8, 8>}, {pipeline_mode = #tpu.pipeline_mode<synchronous>, transform_indices = @transform_3, window_bounds = array<i64: 16, 8>}, {pipeline_mode = #tpu.pipeline_mode<synchronous>, transform_indices = @transform_4, window_bounds = array<i64: 8, 32>}, {pipeline_mode = #tpu.pipeline_mode<synchronous>, transform_indices = @transform_5, window_bounds = array<i64: 1, 32>}, {pipeline_mode = #tpu.pipeline_mode<synchronous>, transform_indices = @transform_6, window_bounds = array<i64: 32, 8>}, {transform_indices = @transform_7, window_bounds = array<i64: 1, 16, 8>}]} {
    %c0 = arith.constant 0 : index
    %c0_0 = arith.constant 0 : index
    %c0_1 = arith.constant 0 : index
    %0 = vector.load %arg3[%c0, %c0_0, %c0_1] : memref<1x16x8xf32, #tpu.memory_space<vmem>>, vector<1x16x8xf32>
    %1 = vector.shape_cast %0 : vector<1x16x8xf32> to vector<16x8xf32>
    %c0_i32 = arith.constant 0 : i32
    %2 = arith.cmpi eq, %arg0, %c0_i32 : i32
    %c0_2 = arith.constant 0 : index
    %c0_3 = arith.constant 0 : index
    %c0_4 = arith.constant 0 : index
    %3 = vector.load %arg2[%c0_2, %c0_3, %c0_4] : memref<1x8x8xf32, #tpu.memory_space<vmem>>, vector<1x8x8xf32>
    %4 = vector.shape_cast %3 : vector<1x8x8xf32> to vector<8x8xf32>
    %cst = arith.constant 0.000000e+00 : f32
    %5 = vector.broadcast %cst : f32 to vector<8x8xf32>
    %6 = arith.select %2, %5, %4 : vector<8x8xf32>
    %c3_i32 = arith.constant 3 : i32
    %7 = arith.cmpi eq, %arg0, %c3_i32 : i32
    %c0_5 = arith.constant 0 : index
    %c0_6 = arith.constant 0 : index
    %c0_7 = arith.constant 0 : index
    %8 = vector.load %arg4[%c0_5, %c0_6, %c0_7] : memref<1x8x8xf32, #tpu.memory_space<vmem>>, vector<1x8x8xf32>
    %9 = vector.shape_cast %8 : vector<1x8x8xf32> to vector<8x8xf32>
    %cst_8 = arith.constant 0.000000e+00 : f32
    %10 = vector.broadcast %cst_8 : f32 to vector<8x8xf32>
    %11 = arith.select %7, %10, %9 : vector<8x8xf32>
    %12 = tpu.concatenate %6, %1, %11 in 0 : vector<8x8xf32>, vector<16x8xf32>, vector<8x8xf32> -> vector<32x8xf32>
    %cst_9 = arith.constant 0.000000e+00 : f32
    %13 = vector.broadcast %cst_9 : f32 to vector<16x8xf32>
    %14 = vector.extract_strided_slice %12 {offsets = [5, 0], sizes = [16, 8], strides = [1, 1]} : vector<32x8xf32> to vector<16x8xf32>
    %c0_10 = arith.constant 0 : index
    %c0_11 = arith.constant 0 : index
    %15 = vector.load %arg5[%c0_10, %c0_11] : memref<16x8xf32, #tpu.memory_space<vmem>>, vector<1x8xf32>
    %16 = vector.broadcast %15 : vector<1x8xf32> to vector<16x8xf32>
    %17 = arith.mulf %14, %16 : vector<16x8xf32>
    %18 = arith.addf %13, %17 : vector<16x8xf32>
    %19 = vector.extract_strided_slice %12 {offsets = [6, 0], sizes = [16, 8], strides = [1, 1]} : vector<32x8xf32> to vector<16x8xf32>
    %c1 = arith.constant 1 : index
    %c0_12 = arith.constant 0 : index
    %20 = vector.load %arg5[%c1, %c0_12] : memref<16x8xf32, #tpu.memory_space<vmem>>, vector<1x8xf32>
    %21 = vector.broadcast %20 : vector<1x8xf32> to vector<16x8xf32>
    %22 = arith.mulf %19, %21 : vector<16x8xf32>
    %23 = arith.addf %18, %22 : vector<16x8xf32>
    %24 = vector.extract_strided_slice %12 {offsets = [7, 0], sizes = [16, 8], strides = [1, 1]} : vector<32x8xf32> to vector<16x8xf32>
    %c2 = arith.constant 2 : index
    %c0_13 = arith.constant 0 : index
    %25 = vector.load %arg5[%c2, %c0_13] : memref<16x8xf32, #tpu.memory_space<vmem>>, vector<1x8xf32>
    %26 = vector.broadcast %25 : vector<1x8xf32> to vector<16x8xf32>
    %27 = arith.mulf %24, %26 : vector<16x8xf32>
    %28 = arith.addf %23, %27 : vector<16x8xf32>
    %29 = vector.extract_strided_slice %12 {offsets = [8, 0], sizes = [16, 8], strides = [1, 1]} : vector<32x8xf32> to vector<16x8xf32>
    %c3 = arith.constant 3 : index
    %c0_14 = arith.constant 0 : index
    %30 = vector.load %arg5[%c3, %c0_14] : memref<16x8xf32, #tpu.memory_space<vmem>>, vector<1x8xf32>
    %31 = vector.broadcast %30 : vector<1x8xf32> to vector<16x8xf32>
    %32 = arith.mulf %29, %31 : vector<16x8xf32>
    %33 = arith.addf %28, %32 : vector<16x8xf32>
    %34 = vector.extract_strided_slice %12 {offsets = [9, 0], sizes = [16, 8], strides = [1, 1]} : vector<32x8xf32> to vector<16x8xf32>
    %c4 = arith.constant 4 : index
    %c0_15 = arith.constant 0 : index
    %35 = vector.load %arg5[%c4, %c0_15] : memref<16x8xf32, #tpu.memory_space<vmem>>, vector<1x8xf32>
    %36 = vector.broadcast %35 : vector<1x8xf32> to vector<16x8xf32>
    %37 = arith.mulf %34, %36 : vector<16x8xf32>
    %38 = arith.addf %33, %37 : vector<16x8xf32>
    %39 = vector.extract_strided_slice %12 {offsets = [10, 0], sizes = [16, 8], strides = [1, 1]} : vector<32x8xf32> to vector<16x8xf32>
    %c5 = arith.constant 5 : index
    %c0_16 = arith.constant 0 : index
    %40 = vector.load %arg5[%c5, %c0_16] : memref<16x8xf32, #tpu.memory_space<vmem>>, vector<1x8xf32>
    %41 = vector.broadcast %40 : vector<1x8xf32> to vector<16x8xf32>
    %42 = arith.mulf %39, %41 : vector<16x8xf32>
    %43 = arith.addf %38, %42 : vector<16x8xf32>
    %44 = vector.extract_strided_slice %12 {offsets = [11, 0], sizes = [16, 8], strides = [1, 1]} : vector<32x8xf32> to vector<16x8xf32>
    %c6 = arith.constant 6 : index
    %c0_17 = arith.constant 0 : index
    %45 = vector.load %arg5[%c6, %c0_17] : memref<16x8xf32, #tpu.memory_space<vmem>>, vector<1x8xf32>
    %46 = vector.broadcast %45 : vector<1x8xf32> to vector<16x8xf32>
    %47 = arith.mulf %44, %46 : vector<16x8xf32>
    %48 = arith.addf %43, %47 : vector<16x8xf32>
    %c7 = arith.constant 7 : index
    %c0_18 = arith.constant 0 : index
    %49 = vector.load %arg5[%c7, %c0_18] : memref<16x8xf32, #tpu.memory_space<vmem>>, vector<1x8xf32>
    %50 = vector.broadcast %49 : vector<1x8xf32> to vector<16x8xf32>
    %51 = arith.addf %48, %50 : vector<16x8xf32>
    %cst_19 = arith.constant dense<0.000000e+00> : vector<16xf32>
    %52 = vector.multi_reduction <add>, %51, %cst_19 [1] : vector<16x8xf32> to vector<16xf32>
    %53 = vector.shape_cast %52 : vector<16xf32> to vector<16x1xf32>
    %cst_20 = arith.constant 8.000000e+00 : f32
    %54 = vector.broadcast %cst_20 : f32 to vector<16x1xf32>
    %55 = arith.divf %53, %54 : vector<16x1xf32>
    %56 = vector.broadcast %55 : vector<16x1xf32> to vector<16x8xf32>
    %57 = arith.subf %51, %56 : vector<16x8xf32>
    %58 = arith.mulf %57, %57 : vector<16x8xf32>
    %cst_21 = arith.constant dense<0.000000e+00> : vector<16xf32>
    %59 = vector.multi_reduction <add>, %58, %cst_21 [1] : vector<16x8xf32> to vector<16xf32>
    %60 = vector.shape_cast %59 : vector<16xf32> to vector<16x1xf32>
    %cst_22 = arith.constant 8.000000e+00 : f32
    %61 = vector.broadcast %cst_22 : f32 to vector<16x1xf32>
    %62 = arith.divf %60, %61 : vector<16x1xf32>
    %cst_23 = arith.constant 9.99999997E-7 : f32
    %63 = vector.broadcast %cst_23 : f32 to vector<16x1xf32>
    %64 = arith.addf %62, %63 : vector<16x1xf32>
    %65 = math.rsqrt %64 : vector<16x1xf32>
    %66 = vector.broadcast %65 : vector<16x1xf32> to vector<16x8xf32>
    %67 = arith.mulf %57, %66 : vector<16x8xf32>
    %c8 = arith.constant 8 : index
    %c0_24 = arith.constant 0 : index
    %68 = vector.load %arg5[%c8, %c0_24] : memref<16x8xf32, #tpu.memory_space<vmem>>, vector<1x8xf32>
    %69 = vector.broadcast %68 : vector<1x8xf32> to vector<16x8xf32>
    %70 = arith.mulf %67, %69 : vector<16x8xf32>
    %c9 = arith.constant 9 : index
    %c0_25 = arith.constant 0 : index
    %71 = vector.load %arg5[%c9, %c0_25] : memref<16x8xf32, #tpu.memory_space<vmem>>, vector<1x8xf32>
    %72 = vector.broadcast %71 : vector<1x8xf32> to vector<16x8xf32>
    %73 = arith.addf %70, %72 : vector<16x8xf32>
    %74 = arith.truncf %73 : vector<16x8xf32> to vector<16x8xbf16>
    %cst_26 = arith.constant 0.000000e+00 : f32
    %75 = vector.broadcast %cst_26 : f32 to vector<16x8xf32>
    %c0_27 = arith.constant 0 : index
    %c0_28 = arith.constant 0 : index
    %76 = vector.load %arg6[%c0_27, %c0_28] : memref<8x32xbf16, #tpu.memory_space<vmem>>, vector<8x16xbf16>
    %cst_29 = arith.constant dense<0.000000e+00> : vector<16x16xf32>
    %77 = tpu.matmul %74, %76, %cst_29 {dimension_numbers = #tpu.dot_dimension_numbers<[1], [0], [0], [1], [0, 0, 1, 1], [], []>} : vector<16x8xbf16>, vector<8x16xbf16>, vector<16x16xf32> -> vector<16x16xf32>
    %c0_30 = arith.constant 0 : index
    %c0_31 = arith.constant 0 : index
    %78 = vector.load %arg7[%c0_30, %c0_31] : memref<1x32xf32, #tpu.memory_space<vmem>>, vector<1x16xf32>
    %79 = vector.broadcast %78 : vector<1x16xf32> to vector<16x16xf32>
    %80 = arith.addf %77, %79 : vector<16x16xf32>
    %cst_32 = arith.constant 5.000000e-01 : f32
    %81 = vector.broadcast %cst_32 : f32 to vector<16x16xf32>
    %82 = arith.mulf %81, %80 : vector<16x16xf32>
    %cst_33 = arith.constant 4.471500e-02 : f32
    %83 = vector.broadcast %cst_33 : f32 to vector<16x16xf32>
    %84 = arith.mulf %83, %80 : vector<16x16xf32>
    %85 = arith.mulf %84, %80 : vector<16x16xf32>
    %86 = arith.mulf %85, %80 : vector<16x16xf32>
    %87 = arith.addf %80, %86 : vector<16x16xf32>
    %cst_34 = arith.constant 0.797884583 : f32
    %88 = vector.broadcast %cst_34 : f32 to vector<16x16xf32>
    %89 = arith.mulf %88, %87 : vector<16x16xf32>
    %90 = math.tanh %89 : vector<16x16xf32>
    %cst_35 = arith.constant 1.000000e+00 : f32
    %91 = vector.broadcast %cst_35 : f32 to vector<16x16xf32>
    %92 = arith.addf %91, %90 : vector<16x16xf32>
    %93 = arith.mulf %82, %92 : vector<16x16xf32>
    %94 = arith.truncf %93 : vector<16x16xf32> to vector<16x16xbf16>
    %c0_36 = arith.constant 0 : index
    %c0_37 = arith.constant 0 : index
    %95 = vector.load %arg8[%c0_36, %c0_37] : memref<32x8xbf16, #tpu.memory_space<vmem>>, vector<16x8xbf16>
    %cst_38 = arith.constant dense<0.000000e+00> : vector<16x8xf32>
    %96 = tpu.matmul %94, %95, %cst_38 {dimension_numbers = #tpu.dot_dimension_numbers<[1], [0], [0], [1], [0, 0, 1, 1], [], []>} : vector<16x16xbf16>, vector<16x8xbf16>, vector<16x8xf32> -> vector<16x8xf32>
    %97 = arith.addf %75, %96 : vector<16x8xf32>
    %c0_39 = arith.constant 0 : index
    %c16 = arith.constant 16 : index
    %98 = vector.load %arg6[%c0_39, %c16] : memref<8x32xbf16, #tpu.memory_space<vmem>>, vector<8x16xbf16>
    %cst_40 = arith.constant dense<0.000000e+00> : vector<16x16xf32>
    %99 = tpu.matmul %74, %98, %cst_40 {dimension_numbers = #tpu.dot_dimension_numbers<[1], [0], [0], [1], [0, 0, 1, 1], [], []>} : vector<16x8xbf16>, vector<8x16xbf16>, vector<16x16xf32> -> vector<16x16xf32>
    %c0_41 = arith.constant 0 : index
    %c16_42 = arith.constant 16 : index
    %100 = vector.load %arg7[%c0_41, %c16_42] : memref<1x32xf32, #tpu.memory_space<vmem>>, vector<1x16xf32>
    %101 = vector.broadcast %100 : vector<1x16xf32> to vector<16x16xf32>
    %102 = arith.addf %99, %101 : vector<16x16xf32>
    %cst_43 = arith.constant 5.000000e-01 : f32
    %103 = vector.broadcast %cst_43 : f32 to vector<16x16xf32>
    %104 = arith.mulf %103, %102 : vector<16x16xf32>
    %cst_44 = arith.constant 4.471500e-02 : f32
    %105 = vector.broadcast %cst_44 : f32 to vector<16x16xf32>
    %106 = arith.mulf %105, %102 : vector<16x16xf32>
    %107 = arith.mulf %106, %102 : vector<16x16xf32>
    %108 = arith.mulf %107, %102 : vector<16x16xf32>
    %109 = arith.addf %102, %108 : vector<16x16xf32>
    %cst_45 = arith.constant 0.797884583 : f32
    %110 = vector.broadcast %cst_45 : f32 to vector<16x16xf32>
    %111 = arith.mulf %110, %109 : vector<16x16xf32>
    %112 = math.tanh %111 : vector<16x16xf32>
    %cst_46 = arith.constant 1.000000e+00 : f32
    %113 = vector.broadcast %cst_46 : f32 to vector<16x16xf32>
    %114 = arith.addf %113, %112 : vector<16x16xf32>
    %115 = arith.mulf %104, %114 : vector<16x16xf32>
    %116 = arith.truncf %115 : vector<16x16xf32> to vector<16x16xbf16>
    %c16_47 = arith.constant 16 : index
    %c0_48 = arith.constant 0 : index
    %117 = vector.load %arg8[%c16_47, %c0_48] : memref<32x8xbf16, #tpu.memory_space<vmem>>, vector<16x8xbf16>
    %cst_49 = arith.constant dense<0.000000e+00> : vector<16x8xf32>
    %118 = tpu.matmul %116, %117, %cst_49 {dimension_numbers = #tpu.dot_dimension_numbers<[1], [0], [0], [1], [0, 0, 1, 1], [], []>} : vector<16x16xbf16>, vector<16x8xbf16>, vector<16x8xf32> -> vector<16x8xf32>
    %119 = arith.addf %97, %118 : vector<16x8xf32>
    %c10 = arith.constant 10 : index
    %c0_50 = arith.constant 0 : index
    %120 = vector.load %arg5[%c10, %c0_50] : memref<16x8xf32, #tpu.memory_space<vmem>>, vector<1x8xf32>
    %121 = vector.broadcast %120 : vector<1x8xf32> to vector<16x8xf32>
    %122 = arith.addf %119, %121 : vector<16x8xf32>
    %c11 = arith.constant 11 : index
    %c0_51 = arith.constant 0 : index
    %123 = vector.load %arg5[%c11, %c0_51] : memref<16x8xf32, #tpu.memory_space<vmem>>, vector<1x8xf32>
    %124 = vector.broadcast %123 : vector<1x8xf32> to vector<16x8xf32>
    %125 = arith.mulf %122, %124 : vector<16x8xf32>
    %126 = arith.addf %1, %125 : vector<16x8xf32>
    %c0_52 = arith.constant 0 : index
    %c0_53 = arith.constant 0 : index
    %c0_54 = arith.constant 0 : index
    %127 = vector.load %arg9[%c0_52, %c0_53, %c0_54] : memref<1x16x8xf32, #tpu.memory_space<vmem>>, vector<1x16x8xf32>
    %128 = vector.shape_cast %127 : vector<1x16x8xf32> to vector<16x8xf32>
    %129 = vector.shape_cast %126 : vector<16x8xf32> to vector<1x16x8xf32>
    tpu.vector_store %arg9[%c0_52, %c0_53, %c0_54], %129 {strides = array<i32>} : memref<1x16x8xf32, #tpu.memory_space<vmem>>, vector<1x16x8xf32>,
    return
  }
  func.func @transform_0(%arg0: i32, %arg1: i32) -> (i32, i32, i32) {
    %c2_i32 = arith.constant 2 : i32
    %0 = arith.muli %arg0, %c2_i32 : i32
    %c1_i32 = arith.constant 1 : i32
    %1 = arith.subi %0, %c1_i32 : i32
    %c0_i32 = arith.constant 0 : i32
    %2 = arith.maxsi %1, %c0_i32 : i32
    %c0_i32_0 = arith.constant 0 : i32
    %c0_i32_1 = arith.constant 0 : i32
    return %arg1, %2, %c0_i32_0 : i32, i32, i32
  }
  func.func @transform_1(%arg0: i32, %arg1: i32) -> (i32, i32, i32) {
    %c0_i32 = arith.constant 0 : i32
    %c0_i32_0 = arith.constant 0 : i32
    return %arg1, %arg0, %c0_i32 : i32, i32, i32
  }
  func.func @transform_2(%arg0: i32, %arg1: i32) -> (i32, i32, i32) {
    %c1_i32 = arith.constant 1 : i32
    %0 = arith.addi %arg0, %c1_i32 : i32
    %c2_i32 = arith.constant 2 : i32
    %1 = arith.muli %0, %c2_i32 : i32
    %c7_i32 = arith.constant 7 : i32
    %2 = arith.minsi %1, %c7_i32 : i32
    %c0_i32 = arith.constant 0 : i32
    %c0_i32_0 = arith.constant 0 : i32
    return %arg1, %2, %c0_i32 : i32, i32, i32
  }
  func.func @transform_3(%arg0: i32, %arg1: i32) -> (i32, i32) {
    %c0_i32 = arith.constant 0 : i32
    %c0_i32_0 = arith.constant 0 : i32
    %c0_i32_1 = arith.constant 0 : i32
    return %c0_i32, %c0_i32_0 : i32, i32
  }
  func.func @transform_4(%arg0: i32, %arg1: i32) -> (i32, i32) {
    %c0_i32 = arith.constant 0 : i32
    %c0_i32_0 = arith.constant 0 : i32
    %c0_i32_1 = arith.constant 0 : i32
    return %c0_i32, %c0_i32_0 : i32, i32
  }
  func.func @transform_5(%arg0: i32, %arg1: i32) -> (i32, i32) {
    %c0_i32 = arith.constant 0 : i32
    %c0_i32_0 = arith.constant 0 : i32
    %c0_i32_1 = arith.constant 0 : i32
    return %c0_i32, %c0_i32_0 : i32, i32
  }
  func.func @transform_6(%arg0: i32, %arg1: i32) -> (i32, i32) {
    %c0_i32 = arith.constant 0 : i32
    %c0_i32_0 = arith.constant 0 : i32
    %c0_i32_1 = arith.constant 0 : i32
    return %c0_i32, %c0_i32_0 : i32, i32
  }
  func.func @transform_7(%arg0: i32, %arg1: i32) -> (i32, i32, i32) {
    %c0_i32 = arith.constant 0 : i32
    %c0_i32_0 = arith.constant 0 : i32
    return %arg1, %arg0, %c0_i32 : i32, i32, i32
  }
}

</mosaic_0001>

<llo_original>
// kernel: convnext_block.1
$region0: #{convnext_block.1}
  #allocation0 [shape = 'u32[]', space=smem, size = 0x4, offset = 0x4, fixed_abs, tag = 'smem constant byte address 0x4 - core index']
  #allocation1 [shape = 'u32[72,128]{1,0:T(1,128)}', space=vmem, size = 0x9000, scoped, tag = 'internal scratch']
  %s0 = inlined_call_operand.vmem [shape: f32[2,64,8], index: 0, kind: input, shape index: {}, may-alias: {0,1,2}]
  %s1 = inlined_call_operand.vmem [shape: f32[2,64,8], index: 1, kind: input, shape index: {}, may-alias: {0,1,2}]
  %s2 = inlined_call_operand.vmem [shape: f32[2,64,8], index: 2, kind: input, shape index: {}, may-alias: {0,1,2}]
  %s3 = inlined_call_operand.vmem [shape: f32[16,8], index: 3, kind: input, shape index: {}]
  %s4 = inlined_call_operand.vmem [shape: bf16[8,32], index: 4, kind: input, shape index: {}]
  %s5 = inlined_call_operand.vmem [shape: f32[1,32], index: 5, kind: input, shape index: {}]
  %s6 = inlined_call_operand.vmem [shape: bf16[32,8], index: 6, kind: input, shape index: {}]
  %s7 = inlined_call_operand.vmem [shape: f32[2,64,8], index: 7, kind: output, shape index: {}]
  %s8 = sld [smem:[#allocation0]]
  $region61: #{convnext_block.1} parent=0
    _
  %s10 = ssub.s32 1, %s8
  %s11 = scalar_select 0, %s10, %s8
  loop: start=0, step=1, limit=10
  $region2: #{convnext_block.1} parent=0 // loop_pre_header
    _
  $region3: #{convnext_block.1} parent=0 // loop_header
    %s13 = sphi 0, %s17
    %p14 = scmp.ge.s32.totalorder %s13, 10
    %s20 = sphi 0, %s32
    %s21 = sphi 0, %s28
    %s22 = sphi 0, %s20
    %s23 = sphi 0, %s21
    %s24 = sphi 0, %s22
    %s25 = sphi 0, %s23
    %s45 = sphi 0, %s47
    %s48 = sphi 0, %s45
    %s49 = sphi 0, %s48
    %s65 = sphi 0, %s49
    %s73 = sphi 0, %s75
    %s76 = sphi 0, %s73
    %s77 = sphi 0, %s76
    %s93 = sphi 0, %s77
    %s109 = sphi 0, %s111
    %s112 = sphi 0, %s109
    %s113 = sphi 0, %s112
    %s129 = sphi 0, %s113
    %s133 = sphi 0, %s133
    %s135 = sphi 0, %s133
    %s136 = sphi 0, %s135
    %s150 = sphi 0, %s136
    %s154 = sphi 0, %s154
    %s156 = sphi 0, %s154
    %s157 = sphi 0, %s156
    %s171 = sphi 0, %s157
    %s175 = sphi 0, %s175
    %s177 = sphi 0, %s175
    %s178 = sphi 0, %s177
    %s192 = sphi 0, %s178
    %s196 = sphi 0, %s196
    %s198 = sphi 0, %s196
    %s199 = sphi 0, %s198
    %s213 = sphi 0, %s199
    %s221 = sphi 0, %s223
    %s224 = sphi 0, %s221
    %s225 = sphi 0, %s224
    %s241 = sphi 0, %s225
  $region4: #{convnext_block.1} parent=0 // loop_header_branch
    %16 = sbr.rel (%p14) target = $region8
  $region5: #{convnext_block.1} parent=0 // loop_body
    %s18 = ssub.s32 %s13, 1
    %s19 = ssub.s32 %s13, 2
    %s26 = sadd.s32 1, %s21
    %p27 = scmp.ge.s32.totalorder %s26, 2
    %s28 = scalar_select %p27, 0, %s26
    %s29 = sadd.s32 1, %s20
    %s30 = scalar_select %p27, %s29, %s20
    %p31 = scmp.ge.s32.totalorder %s30, 4
    %s32 = scalar_select %p31, 0, %s30
    %s33 = smul.u32 %s20, 2
    %s34 = ssub.s32 %s33, 1
    %p35 = scmp.gt.s32.totalorder %s34, 0
    %s36 = scalar_select %p35, %s34, 0
    %s37 = smul.u32 %s32, 2
    %s38 = ssub.s32 %s37, 1
    %p39 = scmp.gt.s32.totalorder %s38, 0
    %s40 = scalar_select %p39, %s38, 0
    %s41 = ssub.s32 %s21, %s28
    %s42 = ssub.s32 %s36, %s40
    %s43 = sor.u32 %s41, %s42
    %p44 = scmp.eq.s32.totalorder %s43, 0
    %s46 = sadd.s32 %s45, 1
    %s47 = scalar_select %p44, %s45, %s46
    %p50 = pneg %p44
    %p51 = scmp.eq.s32.totalorder %s13, 7
    %p52 = por %p50, %p51
    %p53 = scmp.ne.s32.totalorder %s45, %s48
    %p54 = scmp.eq.s32.totalorder %s13, 0
    %p55 = por %p53, %p54
    %p56 = scmp.ne.s32.totalorder %s45, %s48
    %p57 = scmp.eq.s32.totalorder %s18, 7
    %p58 = por %p56, %p57
    %p59 = scmp.ne.s32.totalorder %s48, %s49
    %p60 = scmp.eq.s32.totalorder %s18, 0
    %p61 = por %p59, %p60
    %p62 = scmp.ne.s32.totalorder %s48, %s49
    %p63 = scmp.eq.s32.totalorder %s19, 7
    %p64 = por %p62, %p63
    %p66 = scmp.ne.s32.totalorder %s49, %s65
    %p67 = scmp.eq.s32.totalorder %s19, 0
    %p68 = por %p66, %p67
    %s69 = ssub.s32 %s21, %s28
    %s70 = ssub.s32 %s20, %s32
    %s71 = sor.u32 %s69, %s70
    %p72 = scmp.eq.s32.totalorder %s71, 0
    %s74 = sadd.s32 %s73, 1
    %s75 = scalar_select %p72, %s73, %s74
    %p78 = pneg %p72
    %p79 = scmp.eq.s32.totalorder %s13, 7
    %p80 = por %p78, %p79
    %p81 = scmp.ne.s32.totalorder %s73, %s76
    %p82 = scmp.eq.s32.totalorder %s13, 0
    %p83 = por %p81, %p82
    %p84 = scmp.ne.s32.totalorder %s73, %s76
    %p85 = scmp.eq.s32.totalorder %s18, 7
    %p86 = por %p84, %p85
    %p87 = scmp.ne.s32.totalorder %s76, %s77
    %p88 = scmp.eq.s32.totalorder %s18, 0
    %p89 = por %p87, %p88
    %p90 = scmp.ne.s32.totalorder %s76, %s77
    %p91 = scmp.eq.s32.totalorder %s19, 7
    %p92 = por %p90, %p91
    %p94 = scmp.ne.s32.totalorder %s77, %s93
    %p95 = scmp.eq.s32.totalorder %s19, 0
    %p96 = por %p94, %p95
    %s97 = sadd.s32 %s20, 1
    %s98 = smul.u32 %s97, 2
    %p99 = scmp.lt.s32.totalorder %s98, 7
    %s100 = scalar_select %p99, %s98, 7
    %s101 = sadd.s32 %s32, 1
    %s102 = smul.u32 %s101, 2
    %p103 = scmp.lt.s32.totalorder %s102, 7
    %s104 = scalar_select %p103, %s102, 7
    %s105 = ssub.s32 %s21, %s28
    %s106 = ssub.s32 %s100, %s104
    %s107 = sor.u32 %s105, %s106
    %p108 = scmp.eq.s32.totalorder %s107, 0
    %s110 = sadd.s32 %s109, 1
    %s111 = scalar_select %p108, %s109, %s110
    %p114 = pneg %p108
    %p115 = scmp.eq.s32.totalorder %s13, 7
    %p116 = por %p114, %p115
    %p117 = scmp.ne.s32.totalorder %s109, %s112
    %p118 = scmp.eq.s32.totalorder %s13, 0
    %p119 = por %p117, %p118
    %p120 = scmp.ne.s32.totalorder %s109, %s112
    %p121 = scmp.eq.s32.totalorder %s18, 7
    %p122 = por %p120, %p121
    %p123 = scmp.ne.s32.totalorder %s112, %s113
    %p124 = scmp.eq.s32.totalorder %s18, 0
    %p125 = por %p123, %p124
    %p126 = scmp.ne.s32.totalorder %s112, %s113
    %p127 = scmp.eq.s32.totalorder %s19, 7
    %p128 = por %p126, %p127
    %p130 = scmp.ne.s32.totalorder %s113, %s129
    %p131 = scmp.eq.s32.totalorder %s19, 0
    %p132 = por %p130, %p131
    %s134 = sadd.s32 %s133, 1
    %p137 = scmp.eq.s32.totalorder %s13, 7
    %p138 = scmp.ne.s32.totalorder %s133, %s135
    %p139 = scmp.eq.s32.totalorder %s13, 0
    %p140 = por %p138, %p139
    %p141 = scmp.ne.s32.totalorder %s133, %s135
    %p142 = scmp.eq.s32.totalorder %s18, 7
    %p143 = por %p141, %p142
    %p144 = scmp.ne.s32.totalorder %s135, %s136
    %p145 = scmp.eq.s32.totalorder %s18, 0
    %p146 = por %p144, %p145
    %p147 = scmp.ne.s32.totalorder %s135, %s136
    %p148 = scmp.eq.s32.totalorder %s19, 7
    %p149 = por %p147, %p148
    %p151 = scmp.ne.s32.totalorder %s136, %s150
    %p152 = scmp.eq.s32.totalorder %s19, 0
    %p153 = por %p151, %p152
    %s155 = sadd.s32 %s154, 1
    %p158 = scmp.eq.s32.totalorder %s13, 7
    %p159 = scmp.ne.s32.totalorder %s154, %s156
    %p160 = scmp.eq.s32.totalorder %s13, 0
    %p161 = por %p159, %p160
    %p162 = scmp.ne.s32.totalorder %s154, %s156
    %p163 = scmp.eq.s32.totalorder %s18, 7
    %p164 = por %p162, %p163
    %p165 = scmp.ne.s32.totalorder %s156, %s157
    %p166 = scmp.eq.s32.totalorder %s18, 0
    %p167 = por %p165, %p166
    %p168 = scmp.ne.s32.totalorder %s156, %s157
    %p169 = scmp.eq.s32.totalorder %s19, 7
    %p170 = por %p168, %p169
    %p172 = scmp.ne.s32.totalorder %s157, %s171
    %p173 = scmp.eq.s32.totalorder %s19, 0
    %p174 = por %p172, %p173
    %s176 = sadd.s32 %s175, 1
    %p179 = scmp.eq.s32.totalorder %s13, 7
    %p180 = scmp.ne.s32.totalorder %s175, %s177
    %p181 = scmp.eq.s32.totalorder %s13, 0
    %p182 = por %p180, %p181
    %p183 = scmp.ne.s32.totalorder %s175, %s177
    %p184 = scmp.eq.s32.totalorder %s18, 7
    %p185 = por %p183, %p184
    %p186 = scmp.ne.s32.totalorder %s177, %s178
    %p187 = scmp.eq.s32.totalorder %s18, 0
    %p188 = por %p186, %p187
    %p189 = scmp.ne.s32.totalorder %s177, %s178
    %p190 = scmp.eq.s32.totalorder %s19, 7
    %p191 = por %p189, %p190
    %p193 = scmp.ne.s32.totalorder %s178, %s192
    %p194 = scmp.eq.s32.totalorder %s19, 0
    %p195 = por %p193, %p194
    %s197 = sadd.s32 %s196, 1
    %p200 = scmp.eq.s32.totalorder %s13, 7
    %p201 = scmp.ne.s32.totalorder %s196, %s198
    %p202 = scmp.eq.s32.totalorder %s13, 0
    %p203 = por %p201, %p202
    %p204 = scmp.ne.s32.totalorder %s196, %s198
    %p205 = scmp.eq.s32.totalorder %s18, 7
    %p206 = por %p204, %p205
    %p207 = scmp.ne.s32.totalorder %s198, %s199
    %p208 = scmp.eq.s32.totalorder %s18, 0
    %p209 = por %p207, %p208
    %p210 = scmp.ne.s32.totalorder %s198, %s199
    %p211 = scmp.eq.s32.totalorder %s19, 7
    %p212 = por %p210, %p211
    %p214 = scmp.ne.s32.totalorder %s199, %s213
    %p215 = scmp.eq.s32.totalorder %s19, 0
    %p216 = por %p214, %p215
    %s217 = ssub.s32 %s21, %s28
    %s218 = ssub.s32 %s20, %s32
    %s219 = sor.u32 %s217, %s218
    %p220 = scmp.eq.s32.totalorder %s219, 0
    %s222 = sadd.s32 %s221, 1
    %s223 = scalar_select %p220, %s221, %s222
    %p226 = pneg %p220
    %p227 = scmp.eq.s32.totalorder %s13, 7
    %p228 = por %p226, %p227
    %p229 = scmp.ne.s32.totalorder %s221, %s224
    %p230 = scmp.eq.s32.totalorder %s13, 0
    %p231 = por %p229, %p230
    %p232 = scmp.ne.s32.totalorder %s221, %s224
    %p233 = scmp.eq.s32.totalorder %s18, 7
    %p234 = por %p232, %p233
    %p235 = scmp.ne.s32.totalorder %s224, %s225
    %p236 = scmp.eq.s32.totalorder %s18, 0
    %p237 = por %p235, %p236
    %p238 = scmp.ne.s32.totalorder %s224, %s225
    %p239 = scmp.eq.s32.totalorder %s19, 7
    %p240 = por %p238, %p239
    %p242 = scmp.ne.s32.totalorder %s225, %s241
    %p243 = scmp.eq.s32.totalorder %s19, 0
    %p244 = por %p242, %p243
    %p245 = scmp.le.s32.totalorder 1, %s13
    %p246 = scmp.lt.s32.totalorder %s13, 9
    %p247 = pnand %p245, %p246
    %p248 = pneg %p247
    // Predicated region
    $region9: #{convnext_block.1} parent=5 // pred_check
      _
    $region10: #{convnext_block.1} parent=5 // pred_check_branch
      %250 = sbr.rel (%p247) target = $region12
    $region11: #{convnext_block.1} parent=5 // pred_region
      %s251 = ssub.s32 %s13, 1
      // Predicated region
      $region13: #{convnext_block.1} parent=11 // pred_check
        %p252 = pneg %p146
      $region14: #{convnext_block.1} parent=11 // pred_check_branch
        %254 = sbr.rel (%p252) target = $region16
      $region15: #{convnext_block.1} parent=11 // pred_region
        _
      $region16: #{convnext_block.1} parent=11 // pred_fallthru
        _
      // Predicated region
      $region17: #{convnext_block.1} parent=11 // pred_check
        %p255 = pneg %p167
      $region18: #{convnext_block.1} parent=11 // pred_check_branch
        %257 = sbr.rel (%p255) target = $region20
      $region19: #{convnext_block.1} parent=11 // pred_region
        _
      $region20: #{convnext_block.1} parent=11 // pred_fallthru
        _
      // Predicated region
      $region21: #{convnext_block.1} parent=11 // pred_check
        %p258 = pneg %p188
      $region22: #{convnext_block.1} parent=11 // pred_check_branch
        %260 = sbr.rel (%p258) target = $region24
      $region23: #{convnext_block.1} parent=11 // pred_region
        _
      $region24: #{convnext_block.1} parent=11 // pred_fallthru
        _
      // Predicated region
      $region25: #{convnext_block.1} parent=11 // pred_check
        %p261 = pneg %p209
      $region26: #{convnext_block.1} parent=11 // pred_check_branch
        %263 = sbr.rel (%p261) target = $region28
      $region27: #{convnext_block.1} parent=11 // pred_region
        _
      $region28: #{convnext_block.1} parent=11 // pred_fallthru
        _
    $region12: #{convnext_block.1} parent=5 // pred_fallthru
      _
    %p264 = scmp.lt.s32.totalorder %s13, 8
    // Predicated region
    $region29: #{convnext_block.1} parent=5 // pred_check
      %p265 = pneg %p264
    $region30: #{convnext_block.1} parent=5 // pred_check_branch
      %267 = sbr.rel (%p265) target = $region32
    $region31: #{convnext_block.1} parent=5 // pred_region
      // Predicated region
      $region33: #{convnext_block.1} parent=31 // pred_check
        %p268 = pneg %p55
      $region34: #{convnext_block.1} parent=31 // pred_check_branch
        %270 = sbr.rel (%p268) target = $region36
      $region35: #{convnext_block.1} parent=31 // pred_region
        %s271 = smul.u32 %s20, 2
        %s272 = ssub.s32 %s271, 1
        %p273 = scmp.gt.s32.totalorder %s272, 0
        %s274 = scalar_select %p273, %s272, 0
        %p275 = scmp.lt.s32.totalorder %s21, 1
        %s276 = scalar_select %p275, %s21, 1
        %p277 = scmp.lt.s32.totalorder %s274, 7
        %s278 = scalar_select %p277, %s274, 7
        %s279 = smul.addr %s276, 8
        %s280 = sadd.s32 %s278, %s279
        %s281 = smul.addr %s280, 8
        %s282 = scalar_lea.vmem %s0, %s281
        %s283 = smul.u32 %s20, 2
        %s284 = ssub.s32 %s283, 1
        %p285 = scmp.gt.s32.totalorder %s284, 0
        %s286 = scalar_select %p285, %s284, 0
      $region36: #{convnext_block.1} parent=31 // pred_fallthru
        _
      // Predicated region
      $region37: #{convnext_block.1} parent=31 // pred_check
        %p287 = pneg %p83
      $region38: #{convnext_block.1} parent=31 // pred_check_branch
        %289 = sbr.rel (%p287) target = $region40
      $region39: #{convnext_block.1} parent=31 // pred_region
        %s290 = smul.u32 2, %s20
        %p291 = scmp.lt.s32.totalorder %s21, 1
        %s292 = scalar_select %p291, %s21, 1
        %p293 = scmp.lt.s32.totalorder %s290, 7
        %s294 = scalar_select %p293, %s290, 7
        %s295 = smul.addr %s292, 8
        %s296 = sadd.s32 %s294, %s295
        %s297 = smul.addr %s296, 8
        %s298 = scalar_lea.vmem %s1, %s297
        %s299 = smul.u32 2, %s20
      $region40: #{convnext_block.1} parent=31 // pred_fallthru
        _
      // Predicated region
      $region41: #{convnext_block.1} parent=31 // pred_check
        %p300 = pneg %p119
      $region42: #{convnext_block.1} parent=31 // pred_check_branch
        %302 = sbr.rel (%p300) target = $region44
      $region43: #{convnext_block.1} parent=31 // pred_region
        %s303 = sadd.s32 %s20, 1
        %s304 = smul.u32 %s303, 2
        %p305 = scmp.lt.s32.totalorder %s304, 7
        %s306 = scalar_select %p305, %s304, 7
        %p307 = scmp.lt.s32.totalorder %s21, 1
        %s308 = scalar_select %p307, %s21, 1
        %p309 = scmp.lt.s32.totalorder %s306, 7
        %s310 = scalar_select %p309, %s306, 7
        %s311 = smul.addr %s308, 8
        %s312 = sadd.s32 %s310, %s311
        %s313 = smul.addr %s312, 8
        %s314 = scalar_lea.vmem %s2, %s313
        %s315 = sadd.s32 %s20, 1
        %s316 = smul.u32 %s315, 2
        %p317 = scmp.lt.s32.totalorder %s316, 7
        %s318 = scalar_select %p317, %s316, 7
      $region44: #{convnext_block.1} parent=31 // pred_fallthru
        _
    $region32: #{convnext_block.1} parent=5 // pred_fallthru
      _
    %p319 = scmp.le.s32.totalorder 1, %s13
    %p320 = scmp.lt.s32.totalorder %s13, 9
    %p321 = pnand %p319, %p320
    %p322 = pneg %p321
    // Predicated region
    $region45: #{convnext_block.1} parent=5 // pred_check
      _
    $region46: #{convnext_block.1} parent=5 // pred_check_branch
      %324 = sbr.rel (%p321) target = $region48
    $region47: #{convnext_block.1} parent=5 // pred_region
      %s325 = ssub.s32 %s13, 1
      %s326 = smul.u32 %s22, 2
      %s327 = ssub.s32 %s326, 1
      %p328 = scmp.gt.s32.totalorder %s327, 0
      %s329 = scalar_select %p328, %s327, 0
      %p330 = scmp.lt.s32.totalorder %s23, 1
      %s331 = scalar_select %p330, %s23, 1
      %p332 = scmp.lt.s32.totalorder %s329, 7
      %s333 = scalar_select %p332, %s329, 7
      %s334 = smul.addr %s331, 8
      %s335 = sadd.s32 %s333, %s334
      %s336 = smul.addr %s335, 8
      %s337 = scalar_lea.vmem %s0, %s336
      %p338 = pneg %p61
      %p339 = pneg %p58
      %s340 = smul.u32 2, %s22
      %p341 = scmp.lt.s32.totalorder %s23, 1
      %s342 = scalar_select %p341, %s23, 1
      %p343 = scmp.lt.s32.totalorder %s340, 7
      %s344 = scalar_select %p343, %s340, 7
      %s345 = smul.addr %s342, 8
      %s346 = sadd.s32 %s344, %s345
      %s347 = smul.addr %s346, 8
      %s348 = scalar_lea.vmem %s1, %s347
      %p349 = pneg %p89
      %p350 = pneg %p86
      %s351 = sadd.s32 %s22, 1
      %s352 = smul.u32 %s351, 2
      %p353 = scmp.lt.s32.totalorder %s352, 7
      %s354 = scalar_select %p353, %s352, 7
      %p355 = scmp.lt.s32.totalorder %s23, 1
      %s356 = scalar_select %p355, %s23, 1
      %p357 = scmp.lt.s32.totalorder %s354, 7
      %s358 = scalar_select %p357, %s354, 7
      %s359 = smul.addr %s356, 8
      %s360 = sadd.s32 %s358, %s359
      %s361 = smul.addr %s360, 8
      %s362 = scalar_lea.vmem %s2, %s361
      %p363 = pneg %p125
      %p364 = pneg %p122
      %p365 = pneg %p146
      %p366 = pneg %p143
      %p367 = pneg %p167
      %p368 = pneg %p164
      %p369 = pneg %p188
      %p370 = pneg %p185
      %p371 = pneg %p209
      %p372 = pneg %p206
      %p373 = pneg %p237
      %p374 = pneg %p234
      %s375 = smul.u32 2, %s22
      %p376 = scmp.lt.s32.totalorder %s23, 1
      %s377 = scalar_select %p376, %s23, 1
      %p378 = scmp.lt.s32.totalorder %s375, 7
      %s379 = scalar_select %p378, %s375, 7
      %s380 = smul.addr %s377, 8
      %s381 = sadd.s32 %s379, %s380
      %s382 = smul.addr %s381, 8
      %s383 = scalar_lea.vmem %s7, %s382
      %s384 = smul.u32 %s22, 2
      %s385 = ssub.s32 %s384, 1
      %p386 = scmp.gt.s32.totalorder %s385, 0
      %s387 = scalar_select %p386, %s385, 0
      %p388 = scmp.lt.s32.totalorder %s23, 1
      %s389 = scalar_select %p388, %s23, 1
      %p390 = scmp.lt.s32.totalorder %s387, 7
      %s391 = scalar_select %p390, %s387, 7
      %s392 = smul.addr %s389, 8
      %s393 = sadd.s32 %s391, %s392
      %s394 = smul.addr %s393, 8
      %s395 = scalar_lea.vmem %s0, %s394
      %s396 = smul.u32 %s22, 2
      %s397 = ssub.s32 %s396, 1
      %p398 = scmp.gt.s32.totalorder %s397, 0
      %s399 = scalar_select %p398, %s397, 0
      %s400 = smul.u32 2, %s22
      %p401 = scmp.lt.s32.totalorder %s23, 1
      %s402 = scalar_select %p401, %s23, 1
      %p403 = scmp.lt.s32.totalorder %s400, 7
      %s404 = scalar_select %p403, %s400, 7
      %s405 = smul.addr %s402, 8
      %s406 = sadd.s32 %s404, %s405
      %s407 = smul.addr %s406, 8
      %s408 = scalar_lea.vmem %s1, %s407
      %s409 = smul.u32 2, %s22
      %s410 = sadd.s32 %s22, 1
      %s411 = smul.u32 %s410, 2
      %p412 = scmp.lt.s32.totalorder %s411, 7
      %s413 = scalar_select %p412, %s411, 7
      %p414 = scmp.lt.s32.totalorder %s23, 1
      %s415 = scalar_select %p414, %s23, 1
      %p416 = scmp.lt.s32.totalorder %s413, 7
      %s417 = scalar_select %p416, %s413, 7
      %s418 = smul.addr %s415, 8
      %s419 = sadd.s32 %s417, %s418
      %s420 = smul.addr %s419, 8
      %s421 = scalar_lea.vmem %s2, %s420
      %s422 = sadd.s32 %s22, 1
      %s423 = smul.u32 %s422, 2
      %p424 = scmp.lt.s32.totalorder %s423, 7
      %s425 = scalar_select %p424, %s423, 7
      %s426 = smul.u32 2, %s22
      %p427 = scmp.lt.s32.totalorder %s23, 1
      %s428 = scalar_select %p427, %s23, 1
      %p429 = scmp.lt.s32.totalorder %s426, 7
      %s430 = scalar_select %p429, %s426, 7
      %s431 = smul.addr %s428, 8
      %s432 = sadd.s32 %s430, %s431
      %s433 = smul.addr %s432, 8
      %s434 = scalar_lea.vmem %s7, %s433
      %s435 = smul.u32 2, %s22
      %v437 = vld [vmem:[%s408] sm:$0xff]
      %v438 = vld [vmem:[%s408 + $0x8] sm:$0xff]
      %p439 = scmp.eq.s32.totalorder %s22, 0
      %v440 = vld [vmem:[%s395] sm:$0xff]
      %s441 = scalar_select %p439, 1, 0
      %v442 = vstv %s441
      %vm443 = vcmp.eq.s32.totalorder %v442, 1
      %v444 = vsel %vm443, 0.0, %v440
      %p445 = scmp.eq.s32.totalorder %s22, 3
      %v446 = vld [vmem:[%s421] sm:$0xff]
      %s447 = scalar_select %p445, 1, 0
      %v448 = vstv %s447
      %vm449 = vcmp.eq.s32.totalorder %v448, 1
      %v450 = vsel %vm449, 0.0, %v446
      %v451 = vld [vmem:[%s3] sm:$0x1]
      %v452 = vperm.slane %v451, 0
      %v453 = vmul.f32 %v444, %v452
      %v454 = vmul.f32 %v437, %v452
      %v455 = vmul.f32 %v438, %v452
      %v456 = vadd.f32 %v453, 0.0
      %v457 = vadd.f32 %v454, 0.0
      %v458 = vadd.f32 %v455, 0.0
      %v459 = vld [vmem:[%s3 + $0x1] sm:$0x1]
      %v460 = vperm.slane %v459, 0
      %v461 = vmul.f32 %v444, %v460
      %v462 = vmul.f32 %v437, %v460
      %v463 = vmul.f32 %v438, %v460
      %vm467 = vcmask 1046528
      %v468 = vrot.slane %v461, 1
      %v469 = vrot.slane %v462, 1
      %v470 = vsel %vm467, %v468, %v469
      %v471 = vrot.slane %v463, 1
      %v472 = vsel %vm467, %v469, %v471
      %v476 = vadd.f32 %v456, %v470
      %v477 = vadd.f32 %v457, %v472
      %v478 = vadd.f32 %v458, %v471
      %v479 = vld [vmem:[%s3 + $0x2] sm:$0x1]
      %v480 = vperm.slane %v479, 0
      %v481 = vmul.f32 %v444, %v480
      %v482 = vmul.f32 %v437, %v480
      %v483 = vmul.f32 %v438, %v480
      %vm487 = vcmask 1045504
      %v488 = vrot.slane %v481, 2
      %v489 = vrot.slane %v482, 2
      %v490 = vsel %vm487, %v488, %v489
      %v491 = vrot.slane %v483, 2
      %v492 = vsel %vm487, %v489, %v491
      %v496 = vadd.f32 %v476, %v490
      %v497 = vadd.f32 %v477, %v492
      %v498 = vadd.f32 %v478, %v491
      %v499 = vld [vmem:[%s3 + $0x3] sm:$0x1]
      %v500 = vperm.slane %v499, 0
      %v501 = vmul.f32 %v437, %v500
      %v502 = vmul.f32 %v438, %v500
      %vm505 = vcmask 1044480
      %v506 = vrot.slane %v501, 3
      %v507 = vrot.slane %v502, 3
      %v508 = vsel %vm505, %v506, %v507
      %v512 = vadd.f32 %v496, %v506
      %v513 = vadd.f32 %v497, %v508
      %v514 = vadd.f32 %v498, %v507
      %v515 = vld [vmem:[%s3 + $0x4] sm:$0x1]
      %v516 = vperm.slane %v515, 0
      %v517 = vmul.f32 %v437, %v516
      %v518 = vmul.f32 %v438, %v516
      %v519 = vmul.f32 %v450, %v516
      %vm523 = vcmask 1043456
      %v524 = vrot.slane %v517, 4
      %v525 = vrot.slane %v518, 4
      %v526 = vsel %vm523, %v524, %v525
      %v527 = vrot.slane %v519, 4
      %v528 = vsel %vm523, %v525, %v527
      %v532 = vadd.f32 %v512, %v524
      %v533 = vadd.f32 %v513, %v526
      %v534 = vadd.f32 %v514, %v528
      %v535 = vld [vmem:[%s3 + $0x5] sm:$0x1]
      %v536 = vperm.slane %v535, 0
      %v537 = vmul.f32 %v437, %v536
      %v538 = vmul.f32 %v438, %v536
      %v539 = vmul.f32 %v450, %v536
      %vm543 = vcmask 1042432
      %v544 = vrot.slane %v537, 5
      %v545 = vrot.slane %v538, 5
      %v546 = vsel %vm543, %v544, %v545
      %v547 = vrot.slane %v539, 5
      %v548 = vsel %vm543, %v545, %v547
      %v552 = vadd.f32 %v532, %v544
      %v553 = vadd.f32 %v533, %v546
      %v554 = vadd.f32 %v534, %v548
      %v555 = vld [vmem:[%s3 + $0x6] sm:$0x1]
      %v556 = vperm.slane %v555, 0
      %v557 = vmul.f32 %v437, %v556
      %v558 = vmul.f32 %v438, %v556
      %v559 = vmul.f32 %v450, %v556
      %vm563 = vcmask 1041408
      %v564 = vrot.slane %v557, 6
      %v565 = vrot.slane %v558, 6
      %v566 = vsel %vm563, %v564, %v565
      %v567 = vrot.slane %v559, 6
      %v568 = vsel %vm563, %v565, %v567
      %v572 = vadd.f32 %v552, %v564
      %v573 = vadd.f32 %v553, %v566
      %v574 = vadd.f32 %v554, %v568
      %v575 = vld [vmem:[%s3 + $0x7] sm:$0x1]
      %v576 = vperm.slane %v575, 0
      %v577 = vadd.f32 %v572, %v576
      %v578 = vadd.f32 %v573, %v576
      %v579 = vadd.f32 %v574, %v576
      %vm580 = vcmask 64517
      %v581 = vsel %vm580, %v577, 0.0
      %582 = vadd.xlane.f32.xlu0 %v581
      %v583 = vpop.xlane.xlu0 %582
      %vm584 = vcmask 64512
      %v585 = vsel %vm584, %v578, 0.0
      %586 = vadd.xlane.f32.xlu0 %v585
      %v587 = vpop.xlane.xlu0 %586
      %vm588 = vcmask 61440
      %v589 = vsel %vm588, %v579, 0.0
      %590 = vadd.xlane.f32.xlu0 %v589
      %v591 = vpop.xlane.xlu0 %590
      %v592 = vrcp.pop 8.0
      %v593 = vmul.f32 8.0, %v592
      %v594 = vsub.f32 1.0, %v593
      %v595 = vmul.f32 %v592, %v594
      %v596 = vadd.f32 %v592, %v595
      %vm597 = vweird.f32 %v592
      %v598 = vsel %vm597, %v592, %v596
      %v599 = vmul.f32 %v583, %v598
      %v600 = vmul.f32 %v587, %v598
      %v601 = vmul.f32 %v591, %v598
      %v602 = vsub.f32 %v577, %v599
      %v603 = vsub.f32 %v578, %v600
      %v604 = vsub.f32 %v579, %v601
      %v605 = vmul.f32 %v602, %v602
      %v606 = vmul.f32 %v603, %v603
      %v607 = vmul.f32 %v604, %v604
      %v608 = vsel %vm580, %v605, 0.0
      %609 = vadd.xlane.f32.xlu0 %v608
      %v610 = vpop.xlane.xlu0 %609
      %v611 = vsel %vm584, %v606, 0.0
      %612 = vadd.xlane.f32.xlu0 %v611
      %v613 = vpop.xlane.xlu0 %612
      %v614 = vsel %vm588, %v607, 0.0
      %615 = vadd.xlane.f32.xlu0 %v614
      %v616 = vpop.xlane.xlu0 %615
      %v617 = vmul.f32 %v610, %v598
      %v618 = vmul.f32 %v613, %v598
      %v619 = vmul.f32 %v616, %v598
      %v620 = vadd.f32 %v617, 1e-06
      %v621 = vadd.f32 %v618, 1e-06
      %v622 = vadd.f32 %v619, 1e-06
      %v623 = vrsqrt.pop %v620
      %v624 = vmul.f32 %v623, %v620
      %v625 = vmul.f32 %v624, %v623
      %v626 = vmul.f32 0.5, %v625
      %v627 = vsub.f32 1.5, %v626
      %v628 = vmul.f32 %v623, %v627
      %vm629 = vweird.f32 %v620
      %vm630 = vweird.f32 %v623
      %vm631 = vmor %vm629, %vm630
      %v632 = vsel %vm631, %v623, %v628
      %v633 = vrsqrt.pop %v621
      %v634 = vmul.f32 %v633, %v621
      %v635 = vmul.f32 %v634, %v633
      %v636 = vmul.f32 0.5, %v635
      %v637 = vsub.f32 1.5, %v636
      %v638 = vmul.f32 %v633, %v637
      %vm639 = vweird.f32 %v621
      %vm640 = vweird.f32 %v633
      %vm641 = vmor %vm639, %vm640
      %v642 = vsel %vm641, %v633, %v638
      %v643 = vrsqrt.pop %v622
      %v644 = vmul.f32 %v643, %v622
      %v645 = vmul.f32 %v644, %v643
      %v646 = vmul.f32 0.5, %v645
      %v647 = vsub.f32 1.5, %v646
      %v648 = vmul.f32 %v643, %v647
      %vm649 = vweird.f32 %v622
      %vm650 = vweird.f32 %v643
      %vm651 = vmor %vm649, %vm650
      %v652 = vsel %vm651, %v643, %v648
      %v653 = vmul.f32 %v602, %v632
      %v654 = vmul.f32 %v603, %v642
      %v655 = vmul.f32 %v604, %v652
      %v656 = vld [vmem:[%s3 + $0x8] sm:$0x1]
      %v657 = vperm.slane %v656, 0
      %v658 = vmul.f32 %v653, %v657
      %v659 = vmul.f32 %v654, %v657
      %v660 = vmul.f32 %v655, %v657
      %v661 = vld [vmem:[%s3 + $0x9] sm:$0x1]
      %v662 = vperm.slane %v661, 0
      %v663 = vadd.f32 %v658, %v662
      %v664 = vadd.f32 %v659, %v662
      %v665 = vadd.f32 %v660, %v662
      %v666 = vpack.c.bf16 %v664, %v663
      %v667 = vpack.c.bf16 %v665, %v665
      %v668 = vld [vmem:[%s4] sm:$0xf]
      %v669 = vld [vmem:[%s5] sm:$0x1]
      %v671 = vperm.slane %v669, 0
      %vm673 = vsmask.f32 5376
      %v675 = vshrl.u32 %v666, 16
      %v677 = vrot.slane %v675, 2
      %v678 = vshll.u32 %v666, 16
      %v680 = vrot.slane %v678, 3
      %v681 = vor.u32 %v677, %v680
      %v683 = vshrl.u32 %v667, 16
      %v685 = vrot.slane %v683, 2
      %v686 = vshll.u32 %v667, 16
      %v688 = vrot.slane %v686, 3
      %v689 = vor.u32 %v685, %v688
      %v690 = vsel %vm673, %v681, %v689
      %v692 = vsel %vm584, %v690, 0
      %v695 = vsel %vm523, %v668, 0
      %697 = vmatpush.bf16.msra.mxu0 0
      %698 = vmatpush.bf16.msra.mxu0 0
      %699 = vmatpush.bf16.msra.mxu0 0
      %700 = vmatpush.bf16.msra.mxu0 0
      %701 = vmatpush.bf16.msra.mxu0 0
      %702 = vmatpush.bf16.msra.mxu0 0
      %703 = vmatpush.bf16.msra.mxu0 0
      %704 = vmatpush.bf16.msra.mxu0 %v695
      %705 = vmatmul.bf16.gmra.mxu0 %v692
      %v706 = vpop.f32.mrf.mxu0
      %v707 = vadd.f32 %v671, %v706
      %v708 = vpop.f32.mrf.mxu0
      %v709 = vadd.f32 %v671, %v708
      %710 = vdwg.mxu0
      %v711 = vmul.f32 %v707, 0.5
      %v712 = vmul.f32 %v709, 0.5
      %v713 = vmul.f32 %v707, 0.044715
      %v714 = vmul.f32 %v709, 0.044715
      %v715 = vmul.f32 %v713, %v707
      %v716 = vmul.f32 %v714, %v709
      %v717 = vmul.f32 %v715, %v707
      %v718 = vmul.f32 %v716, %v709
      %v719 = vadd.f32 %v707, %v717
      %v720 = vadd.f32 %v709, %v718
      %v721 = vmul.f32 %v719, 0.7978846
      %v722 = vmul.f32 %v720, 0.7978846
      %v723 = vtanh.pop %v721
      %v724 = vtanh.pop %v722
      %v725 = vadd.f32 %v723, 1.0
      %v726 = vadd.f32 %v724, 1.0
      %v727 = vmul.f32 %v711, %v725
      %v728 = vmul.f32 %v712, %v726
      %v729 = vpack.c.bf16 %v728, %v727
      %v730 = vld [vmem:[%s6] sm:$0xf]
      %v731 = vld [vmem:[%s6 + $0x4] sm:$0xf]
      %v733 = vunpack.c.l.b16 %v668
      %v734 = vpack.c.b16 %v733, %v733
      %735 = vrot.lane.b32.xlu0 %v734, 112
      %v736 = vpop.permute.xlu0 %735
      %737 = vrot.lane.b32.xlu0 %v671, 112
      %v738 = vpop.permute.xlu0 %737
      %v741 = vsel %vm523, %v736, 0
      %743 = vmatpush.bf16.msra.mxu0 0
      %744 = vmatpush.bf16.msra.mxu0 0
      %745 = vmatpush.bf16.msra.mxu0 0
      %746 = vmatpush.bf16.msra.mxu0 0
      %747 = vmatpush.bf16.msra.mxu0 0
      %748 = vmatpush.bf16.msra.mxu0 0
      %749 = vmatpush.bf16.msra.mxu0 0
      %750 = vmatpush.bf16.msra.mxu0 %v741
      %751 = vmatmul.bf16.gmra.mxu0 %v692
      %v752 = vpop.f32.mrf.mxu0
      %v753 = vadd.f32 %v738, %v752
      %v754 = vpop.f32.mrf.mxu0
      %v755 = vadd.f32 %v738, %v754
      %756 = vdwg.mxu0
      %v757 = vmul.f32 %v753, 0.5
      %v758 = vmul.f32 %v755, 0.5
      %v759 = vmul.f32 %v753, 0.044715
      %v760 = vmul.f32 %v755, 0.044715
      %v761 = vmul.f32 %v759, %v753
      %v762 = vmul.f32 %v760, %v755
      %v763 = vmul.f32 %v761, %v753
      %v764 = vmul.f32 %v762, %v755
      %v765 = vadd.f32 %v753, %v763
      %v766 = vadd.f32 %v755, %v764
      %v767 = vmul.f32 %v765, 0.7978846
      %v768 = vmul.f32 %v766, 0.7978846
      %v769 = vtanh.pop %v767
      %v770 = vtanh.pop %v768
      %v771 = vadd.f32 %v769, 1.0
      %v772 = vadd.f32 %v770, 1.0
      %v773 = vmul.f32 %v757, %v771
      %v774 = vmul.f32 %v758, %v772
      %v775 = vpack.c.bf16 %v774, %v773
      %v776 = vld [vmem:[%s6 + $0x8] sm:$0xf]
      %v777 = vld [vmem:[%s6 + $0xc] sm:$0xf]
      %v780 = vunpack.c.l.b16 %v776
      %v781 = vunpack.c.l.b16 %v777
      %v782 = vpack.c.b16 %v781, %v780
      %vm784 = vcmask 130048
      %v786 = vsel %vm784, %v775, 0
      %788 = vmatpush.bf16.msra.mxu0 0
      %789 = vmatpush.bf16.msra.mxu0 0
      %790 = vmatpush.bf16.msra.mxu0 0
      %791 = vmatpush.bf16.msra.mxu0 0
      %792 = vmatpush.bf16.msra.mxu0 0
      %793 = vmatpush.bf16.msra.mxu0 0
      %794 = vmatpush.bf16.msra.mxu0 0
      %795 = vmatpush.bf16.msra.mxu0 %v782
      %796 = vmatmul.bf16.gmra.mxu0 %v786
      %v797 = vpop.f32.mrf.mxu0
      %v798 = vadd.f32 0.0, %v797
      %v799 = vpop.f32.mrf.mxu0
      %v800 = vadd.f32 0.0, %v799
      %801 = vdwg.mxu0
      %v804 = vunpack.c.l.b16 %v730
      %v805 = vunpack.c.l.b16 %v731
      %v806 = vpack.c.b16 %v805, %v804
      %v809 = vsel %vm784, %v729, 0
      %811 = vmatpush.bf16.msra.mxu0 0
      %812 = vmatpush.bf16.msra.mxu0 0
      %813 = vmatpush.bf16.msra.mxu0 0
      %814 = vmatpush.bf16.msra.mxu0 0
      %815 = vmatpush.bf16.msra.mxu0 0
      %816 = vmatpush.bf16.msra.mxu0 0
      %817 = vmatpush.bf16.msra.mxu0 0
      %818 = vmatpush.bf16.msra.mxu0 %v806
      %819 = vmatmul.bf16.gmra.mxu0 %v809
      %v820 = vpop.f32.mrf.mxu0
      %v821 = vadd.f32 %v798, %v820
      %v822 = vpop.f32.mrf.mxu0
      %v823 = vadd.f32 %v800, %v822
      %824 = vdwg.mxu0
      %v825 = vld [vmem:[%s3 + $0xa] sm:$0x1]
      %v826 = vperm.slane %v825, 0
      %v827 = vadd.f32 %v821, %v826
      %v828 = vadd.f32 %v823, %v826
      %v829 = vld [vmem:[%s3 + $0xb] sm:$0x1]
      %v830 = vperm.slane %v829, 0
      %v831 = vmul.f32 %v827, %v830
      %v832 = vmul.f32 %v828, %v830
      %v833 = vadd.f32 %v437, %v831
      %v834 = vadd.f32 %v438, %v832
      %835 = vst.msk [vmem:[%s434] sm:$0xff] %vm584, %v833
      %836 = vst.msk [vmem:[%s434 + $0x8] sm:$0xff] %vm584, %v834
      %s837 = smul.u32 2, %s22
      %p838 = scmp.lt.s32.totalorder %s23, 1
      %s839 = scalar_select %p838, %s23, 1
      %p840 = scmp.lt.s32.totalorder %s837, 7
      %s841 = scalar_select %p840, %s837, 7
      %s842 = smul.addr %s839, 8
      %s843 = sadd.s32 %s841, %s842
      %s844 = smul.addr %s843, 8
      %s845 = scalar_lea.vmem %s7, %s844
      // Predicated region
      $region49: #{convnext_block.1} parent=47 // pred_check
        %p846 = pneg %p234
      $region50: #{convnext_block.1} parent=47 // pred_check_branch
        %848 = sbr.rel (%p846) target = $region52
      $region51: #{convnext_block.1} parent=47 // pred_region
        %s849 = smul.u32 2, %s22
      $region52: #{convnext_block.1} parent=47 // pred_fallthru
        _
    $region48: #{convnext_block.1} parent=5 // pred_fallthru
      _
    %p850 = scmp.le.s32.totalorder 2, %s13
    // Predicated region
    $region53: #{convnext_block.1} parent=5 // pred_check
      %p851 = pneg %p850
    $region54: #{convnext_block.1} parent=5 // pred_check_branch
      %853 = sbr.rel (%p851) target = $region56
    $region55: #{convnext_block.1} parent=5 // pred_region
      %s854 = ssub.s32 %s13, 2
      // Predicated region
      $region57: #{convnext_block.1} parent=55 // pred_check
        %p855 = pneg %p240
      $region58: #{convnext_block.1} parent=55 // pred_check_branch
        %857 = sbr.rel (%p855) target = $region60
      $region59: #{convnext_block.1} parent=55 // pred_region
        %s858 = smul.u32 2, %s24
        %p859 = scmp.lt.s32.totalorder %s25, 1
        %s860 = scalar_select %p859, %s25, 1
        %p861 = scmp.lt.s32.totalorder %s858, 7
        %s862 = scalar_select %p861, %s858, 7
        %s863 = smul.addr %s860, 8
        %s864 = sadd.s32 %s862, %s863
        %s865 = smul.addr %s864, 8
        %s866 = scalar_lea.vmem %s7, %s865
      $region60: #{convnext_block.1} parent=55 // pred_fallthru
        _
    $region56: #{convnext_block.1} parent=5 // pred_fallthru
      _
  $region6: #{convnext_block.1} parent=0 // loop_footer
    %s17 = sadd.s32 1, %s13
  $region7: #{convnext_block.1} parent=0 // loop_footer_branch
    %12 = sbr.rel target = $region3
  $region8: #{convnext_block.1} parent=0 // loop_exit
    _

</llo_original>
